<compile_context>
chip_gen: v7x
topology: tpu7x:2x2x1
jax: 0.10.0
libtpu: 0.0.40
codegen_flags: <defaults>
</compile_context>

<pallas_src>
import jax
import jax.numpy as jnp
from jax.experimental import pallas as pl
from jax.experimental.pallas import tpu as pltpu


def _sigmoid_kernel(k_ref, x_ref, o_ref):
    x = x_ref[...].astype(jnp.float32)      # compute in f32; cast on store
    k = k_ref[0]                            # SMEM scalar -> vector broadcast
    o_ref[...] = (1.0 / (1.0 + jnp.exp(-(k * x)))).astype(o_ref.dtype)


def _default_block_bytes():
    """Generation-aware input-block budget."""
    try:
        kind = jax.devices()[0].device_kind.lower()
    except Exception:
        kind = ""
    if "v5" in kind:                 # v5e: 16 MiB default scoped VMEM
        return 2 * 1024 * 1024
    return 4 * 1024 * 1024           # v6e / v7x


def _run_sigmoid_2d(x2d, k_arr, out_dtype, block_bytes):
    """Run the kernel on a lane-dense (rows, cols) slab (cols % 128 == 0)."""
    rows, cols = x2d.shape
    in_item = jnp.dtype(x2d.dtype).itemsize
    out_item = jnp.dtype(out_dtype).itemsize
    # Sublane packing of the narrower of the in/out dtypes (8/16/32).
    sub = max(8, 32 // min(in_item, out_item))
    total_bytes = rows * cols * in_item

    if rows <= 2 * sub or total_bytes <= 1 * 1024 * 1024:
        # Tiny tensor: one full-extent block (always legal), no split overhead.
        tile_rows = rows
    else:
        budget_rows = max(sub, (block_bytes // (cols * in_item)) // sub * sub)
        # Guarantee >= MIN_STEPS grid steps so the pipeline overlaps DMA with
        # compute/writeback and both v7x TensorCores participate.
        MIN_STEPS = 4
        cap_rows = max(sub, (rows // MIN_STEPS) // sub * sub)
        tile_rows = min(budget_rows, cap_rows)

    grid = (pl.cdiv(rows, tile_rows),)

    # Double-buffered input + output blocks, plus headroom for Mosaic scratch.
    block_vmem = 2 * tile_rows * cols * (in_item + out_item)
    vmem_limit = min(32 * 1024 * 1024,
                     max(16 * 1024 * 1024, block_vmem + 2 * 1024 * 1024))

    n_block = rows * cols
    return pl.pallas_call(
        _sigmoid_kernel,
        out_shape=jax.ShapeDtypeStruct((rows, cols), out_dtype),
        grid_spec=pltpu.PrefetchScalarGridSpec(
            num_scalar_prefetch=0,
            grid=grid,
            in_specs=[
                pl.BlockSpec(memory_space=pltpu.MemorySpace.SMEM),   # k scalar
                pl.BlockSpec((tile_rows, cols), lambda i: (i, 0)),   # x tile
            ],
            out_specs=pl.BlockSpec((tile_rows, cols), lambda i: (i, 0)),
        ),
        compiler_params=pltpu.CompilerParams(
            # "parallel" shards the axis across TensorCores on multi-TC chips.
            dimension_semantics=("parallel",),
            vmem_limit_bytes=vmem_limit,
        ),
        cost_estimate=pl.CostEstimate(
            flops=3 * n_block,
            transcendentals=n_block,
            bytes_accessed=n_block * (in_item + out_item),
        ),
    )(k_arr, x2d)


def sigmoid_pallas(x, k, *, block_bytes=None):
    """Elementwise sigmoid(k * x) via a Pallas TPU kernel.

    x: any-shape array. k: scalar (Python number or 0-d array), passed through
    SMEM so varying k does not force a recompile. Integer inputs return f32.
    """
    if block_bytes is None:
        block_bytes = _default_block_bytes()

    orig_shape = x.shape
    in_dtype = x.dtype
    out_dtype = in_dtype if jnp.issubdtype(in_dtype, jnp.floating) else jnp.float32
    n = x.size
    if n == 0:
        return jnp.zeros(orig_shape, out_dtype)

    k_arr = jnp.asarray([k], dtype=jnp.float32)

    # Widest lane-dense view (cols multiple of 128) that divides n exactly.
    cols = None
    for c in (32768, 16384, 8192, 4096, 2048, 1024, 512, 256, 128):
        if n % c == 0:
            cols = c
            break

    if cols is not None:
        out2d = _run_sigmoid_2d(x.reshape(n // cols, cols), k_arr, out_dtype,
                                block_bytes)
        return out2d.reshape(orig_shape)

    # Ragged element count: kernel on the 128-aligned prefix, tiny tail in jnp.
    x_flat = x.reshape(-1)
    n_main = (n // 128) * 128
    k_f = jnp.asarray(k, dtype=jnp.float32)
    tail = x_flat[n_main:].astype(jnp.float32)
    tail_out = (1.0 / (1.0 + jnp.exp(-(k_f * tail)))).astype(out_dtype)
    if n_main == 0:
        return tail_out.reshape(orig_shape)
    main_out = _run_sigmoid_2d(x_flat[:n_main].reshape(n_main // 128, 128),
                               k_arr, out_dtype, block_bytes)
    return jnp.concatenate([main_out.reshape(-1), tail_out]).reshape(orig_shape)


if __name__ == "__main__":
    key = jax.random.PRNGKey(0)
    k = 3.0  # module hyperparameter from Sigmoid(k)
    keys = jax.random.split(key, 6)

    # 1) NCHW f32 input consistent with the module's typical use.
    x = jax.random.normal(keys[0], (2, 4, 16, 16), dtype=jnp.float32)
    y = jax.block_until_ready(sigmoid_pallas(x, k))
    y_ref = jax.nn.sigmoid(k * x)
    assert y.shape == x.shape and y.dtype == x.dtype
    assert jnp.max(jnp.abs(y - y_ref)) < 1e-5

    # 2) bf16 input: kernel computes in f32, casts only on the store.
    xb = jax.random.normal(keys[1], (2, 4, 16, 16), dtype=jnp.bfloat16)
    yb = jax.block_until_ready(sigmoid_pallas(xb, k))
    yb_ref = jax.nn.sigmoid(k * xb.astype(jnp.float32))
    assert yb.shape == xb.shape and yb.dtype == xb.dtype
    assert jnp.max(jnp.abs(yb.astype(jnp.float32) - yb_ref)) < 1e-2

    # 3) Integer input -> float32 output (torch.sigmoid semantics).
    xi = jax.random.randint(keys[2], (2, 4, 16, 16), -5, 6, dtype=jnp.int32)
    yi = jax.block_until_ready(sigmoid_pallas(xi, k))
    yi_ref = jax.nn.sigmoid(k * xi.astype(jnp.float32))
    assert yi.shape == xi.shape and yi.dtype == jnp.float32
    assert jnp.max(jnp.abs(yi - yi_ref)) < 1e-5

    # 4) Ragged element count, smaller than one lane group (pure jnp tail).
    xr = jax.random.normal(keys[3], (3, 5, 7), dtype=jnp.float32)
    yr = jax.block_until_ready(sigmoid_pallas(xr, k))
    assert yr.shape == xr.shape and yr.dtype == xr.dtype
    assert jnp.max(jnp.abs(yr - jax.nn.sigmoid(k * xr))) < 1e-5

    # 5) Ragged element count with a 128-aligned prefix + small tail.
    xr2 = jax.random.normal(keys[4], (3, 50, 11), dtype=jnp.float32)
    yr2 = jax.block_until_ready(sigmoid_pallas(xr2, k))
    assert yr2.shape == xr2.shape and yr2.dtype == xr2.dtype
    assert jnp.max(jnp.abs(yr2 - jax.nn.sigmoid(k * xr2))) < 1e-5

    # 6) Multi-step grid with a partial (masked) last block.
    xp = jax.random.normal(keys[5], (128 * 8191,), dtype=jnp.float32)
    yp = jax.block_until_ready(sigmoid_pallas(xp, k))
    assert yp.shape == xp.shape and yp.dtype == xp.dtype
    assert jnp.max(jnp.abs(yp - jax.nn.sigmoid(k * xp))) < 1e-5

    print("KERNEL_OK")
</pallas_src>

<mosaic_0001>
module attributes {stable_mosaic.version = 11 : i64} {
  func.func @_sigmoid_kernel(%arg0: i32, %arg1: memref<1xf32, #tpu.memory_space<smem>>, %arg2: memref<1x2048xf32, #tpu.memory_space<vmem>>, %arg3: memref<1x2048xf32, #tpu.memory_space<vmem>>) attributes {dimension_semantics = [#tpu.dimension_semantics<parallel>], iteration_bounds = array<i64: 1>, scalar_prefetch = 0 : i64, scratch_operands = 0 : i64, tpu.core_type = #tpu.core_type<tc>, window_params = [{transform_indices = @transform_0, window_bounds = array<i64: 1>}, {transform_indices = @transform_1, window_bounds = array<i64: 1, 2048>}, {transform_indices = @transform_2, window_bounds = array<i64: 1, 2048>}]} {
    %c0 = arith.constant 0 : index
    %c0_0 = arith.constant 0 : index
    %0 = vector.load %arg2[%c0, %c0_0] : memref<1x2048xf32, #tpu.memory_space<vmem>>, vector<1x2048xf32>
    %c0_1 = arith.constant 0 : index
    %1 = memref.load %arg1[%c0_1] : memref<1xf32, #tpu.memory_space<smem>>
    %2 = vector.broadcast %1 : f32 to vector<1x2048xf32>
    %3 = arith.mulf %2, %0 : vector<1x2048xf32>
    %cst = arith.constant 0.000000e+00 : f32
    %4 = vector.broadcast %cst : f32 to vector<1x2048xf32>
    %5 = arith.subf %4, %3 : vector<1x2048xf32>
    %6 = math.exp %5 : vector<1x2048xf32>
    %cst_2 = arith.constant 1.000000e+00 : f32
    %7 = vector.broadcast %cst_2 : f32 to vector<1x2048xf32>
    %8 = arith.addf %7, %6 : vector<1x2048xf32>
    %cst_3 = arith.constant 1.000000e+00 : f32
    %9 = vector.broadcast %cst_3 : f32 to vector<1x2048xf32>
    %10 = arith.divf %9, %8 : vector<1x2048xf32>
    %c0_4 = arith.constant 0 : index
    %c0_5 = arith.constant 0 : index
    %11 = vector.load %arg3[%c0_4, %c0_5] : memref<1x2048xf32, #tpu.memory_space<vmem>>, vector<1x2048xf32>
    tpu.vector_store %arg3[%c0_4, %c0_5], %10 {strides = array<i32>} : memref<1x2048xf32, #tpu.memory_space<vmem>>, vector<1x2048xf32>,
    return
  }
  func.func @transform_0(%arg0: i32) -> i32 {
    %c0_i32 = arith.constant 0 : i32
    %c0_i32_0 = arith.constant 0 : i32
    return %c0_i32 : i32
  }
  func.func @transform_1(%arg0: i32) -> (i32, i32) {
    %c0_i32 = arith.constant 0 : i32
    %c0_i32_0 = arith.constant 0 : i32
    return %arg0, %c0_i32 : i32, i32
  }
  func.func @transform_2(%arg0: i32) -> (i32, i32) {
    %c0_i32 = arith.constant 0 : i32
    %c0_i32_0 = arith.constant 0 : i32
    return %arg0, %c0_i32 : i32, i32
  }
}

</mosaic_0001>

<llo_original>
// kernel: tpu_custom_call.1
$region0: #{tpu_custom_call.1}
  #allocation0 [shape = 'u32[]', space=smem, size = 0x4, offset = 0x4, fixed_abs, tag = 'smem constant byte address 0x4 - core index']
  #allocation1 [shape = 'u32[144,128]{1,0:T(1,128)}', space=vmem, size = 0x12000, scoped, tag = 'internal scratch']
  #allocation2 [shape = 'f32[1]{0:T(128)S(6)}', space=smem, size = 0x200, scoped, tag = 'scoped memory for tpu_custom_call.1']
  %s0 = inlined_call_operand.<no memory space> [shape: f32[1], index: 0, kind: input, shape index: {}]
  %s1 = inlined_call_operand.hbm [shape: f32[1,2048], index: 1, kind: input, shape index: {}]
  %s2 = inlined_call_operand.hbm [shape: f32[1,2048], index: 2, kind: output, shape index: {}]
  %s3 = sld [smem:[#allocation0]]
  $region22: #{tpu_custom_call.1} parent=0
    _
  %s5 = ssub.s32 1, %s3
  %s6 = scalar_select 0, %s5, %s3
  %7 = sst [smem:[#allocation2]] %s0
  $region1: #{tpu_custom_call.1} parent=0
    #allocation3 [shape = 'u8[8192]{0}', space=vmem, size = 0x2000, scoped, tag = 'input window, operand 1, single buffered']
    #allocation4 [shape = 's32[1]{0}', space=sflag, size = 0x4, scoped, tag = 'scoped memory for tpu_custom_call.1']
    #allocation5 [shape = 's32[1]{0}', space=sflag, size = 0x4, scoped, tag = 'scoped memory for tpu_custom_call.1']
    #allocation6 [shape = 'u8[8192]{0}', space=vmem, size = 0x2000, scoped, tag = 'output window, operand 0, single buffered']
    %8 = vsyncpa [#allocation4], 0
    %9 = vsyncpa [#allocation5], 0
    // Predicated region
    $region2: #{tpu_custom_call.1} parent=1 // pred_check
      _
    $region3: #{tpu_custom_call.1} parent=1 // pred_check_branch
      %11 = sbr.rel (0) target = $region5
    $region4: #{tpu_custom_call.1} parent=1 // pred_region
      _
    $region5: #{tpu_custom_call.1} parent=1 // pred_fallthru
      _
    // Predicated region
    $region6: #{tpu_custom_call.1} parent=1 // pred_check
      _
    $region7: #{tpu_custom_call.1} parent=1 // pred_check_branch
      %13 = sbr.rel (0) target = $region9
    $region8: #{tpu_custom_call.1} parent=1 // pred_region
      %s15 = ssub.s32 256, 256
      %16 = vsyncadd [#allocation4], %s15
      %s18 = sshll.u32 [#allocation3], 4
      %s19 = int_to_ptr.vmem [resolvable:$true] %s18
      %21 = dma.hbm_to_vmem [thread:$0]  %s1, 256, %s19, [#allocation4]
    $region9: #{tpu_custom_call.1} parent=1 // pred_fallthru
      _
    // Predicated region
    $region10: #{tpu_custom_call.1} parent=1 // pred_check
      _
    $region11: #{tpu_custom_call.1} parent=1 // pred_check_branch
      %23 = sbr.rel (0) target = $region13
    $region12: #{tpu_custom_call.1} parent=1 // pred_region
      %24 = dma.done [#allocation4], 256
    $region13: #{tpu_custom_call.1} parent=1 // pred_fallthru
      _
    %v25 = vld [vmem:[#allocation3] sm:$0xff]
    %v26 = vld [vmem:[#allocation3 + $0x8] sm:$0xff]
    %s27 = sld [smem:[#allocation2]]
    %v28 = vstv %s27
    %v29 = vmul.f32 %v28, %v25
    %v30 = vmul.f32 %v28, %v26
    %v31 = vsub.f32 0.0, %v29
    %v32 = vsub.f32 0.0, %v30
    %v33 = vmul.f32 %v31, 1.442695
    %v34 = vpow.pop %v33
    %v35 = vmul.f32 %v32, 1.442695
    %v36 = vpow.pop %v35
    %v37 = vadd.f32 %v34, 1.0
    %v38 = vadd.f32 %v36, 1.0
    %v39 = vrcp.pop %v37
    %v40 = vmul.f32 1.0, %v39
    %v41 = vrcp.pop %v38
    %v42 = vmul.f32 1.0, %v41
    %43 = vst [vmem:[#allocation6] sm:$0xff] %v40
    %44 = vst [vmem:[#allocation6 + $0x8] sm:$0xff] %v42
    // Predicated region
    $region14: #{tpu_custom_call.1} parent=1 // pred_check
      _
    $region15: #{tpu_custom_call.1} parent=1 // pred_check_branch
      %46 = sbr.rel (0) target = $region17
    $region16: #{tpu_custom_call.1} parent=1 // pred_region
      %s48 = ssub.s32 256, 256
      %49 = vsyncadd [#allocation5], %s48
      %s51 = sshll.u32 [#allocation6], 4
      %s52 = int_to_ptr.vmem [resolvable:$true] %s51
      %54 = dma.vmem_to_hbm [thread:$0]  %s52, 256, %s2, [#allocation5]
    $region17: #{tpu_custom_call.1} parent=1 // pred_fallthru
      _
    // Predicated region
    $region18: #{tpu_custom_call.1} parent=1 // pred_check
      _
    $region19: #{tpu_custom_call.1} parent=1 // pred_check_branch
      %56 = sbr.rel (0) target = $region21
    $region20: #{tpu_custom_call.1} parent=1 // pred_region
      %57 = dma.done [#allocation5], 256
    $region21: #{tpu_custom_call.1} parent=1 // pred_fallthru
      _
    %58 = vsyncpa [#allocation4], 1
    %59 = vsyncpa [#allocation5], 1

</llo_original>
